<compile_context>
chip_gen: v5e
topology: v5e:2x2
jax: 0.10.0
libtpu: 0.0.40
codegen_flags: <defaults>
</compile_context>

<pallas_src>
import math

import jax
import jax.numpy as jnp
from jax import lax
from jax.experimental import pallas as pl
from jax.experimental.pallas import tpu as pltpu


# --------------------------------------------------------------------------- #
# Kernel
# --------------------------------------------------------------------------- #
def _make_mlp_kernel(num_layers, lane_dense_out, act_dtype):
    """Builds the kernel body (layer count / output layout are static)."""

    def kernel(xi_ref, xj_ref, *refs):
        # refs = (w0, b0, w1, b1, ..., w_{L-1}, b_{L-1}, out_ref)
        out_ref = refs[-1]
        param_refs = refs[:-1]

        # Fused elementwise pair-feature product.
        x = (xi_ref[...] * xj_ref[...]).astype(act_dtype)

        # Hidden layers: Linear -> ReLU -> dropout(identity in eval).
        for l in range(num_layers - 1):
            w = param_refs[2 * l][...]                          # (C_in, C_out)
            b = param_refs[2 * l + 1][...]                      # (1, C_out) f32
            y = jnp.dot(x, w, preferred_element_type=jnp.float32) + b
            y = jnp.maximum(y, 0.0)
            x = y.astype(act_dtype)

        w_ref = param_refs[2 * (num_layers - 1)]
        b_ref = param_refs[2 * (num_layers - 1) + 1]

        if lane_dense_out:
            # Final 1-wide layer, produced directly as a lane-dense (1, tile_n)
            # row:  y[0, n] = sum_c w_row[0, c] * x[n, c] + b.
            w_row = w_ref[...]                                  # (1, C_last)
            y = lax.dot_general(
                w_row, x,
                dimension_numbers=(((1,), (1,)), ((), ())),
                preferred_element_type=jnp.float32)             # (1, tile_n)
            y = y + b_ref[...]                                  # (1, 1) bias
            out_ref[...] = y.astype(out_ref.dtype)
        else:
            w = w_ref[...]                                      # (C_in, C_out)
            b = b_ref[...]                                      # (1, C_out)
            y = jnp.dot(x, w, preferred_element_type=jnp.float32) + b
            out_ref[...] = y.astype(out_ref.dtype)

    return kernel


# --------------------------------------------------------------------------- #
# Device / sizing helpers
# --------------------------------------------------------------------------- #
def _vmem_capacity_bytes():
    try:
        return int(pltpu.get_tpu_info().vmem_capacity_bytes)
    except Exception:
        return 64 << 20  # safe lower bound across v5e / v6e / v7x


def _tensorcores_per_chip():
    try:
        kind = jax.devices()[0].device_kind.lower()
    except Exception:
        return 1
    return 2 if "v7" in kind else 1  # v7x: 2 TCs/chip; v5e/v6e: 1


def _const_param_spec(shape):
    """Grid-invariant parameter block; single-buffered when supported."""
    try:
        return pl.BlockSpec(shape, lambda i: (0, 0), pipeline_mode=pl.Buffered(1))
    except Exception:
        return pl.BlockSpec(shape, lambda i: (0, 0))


# --------------------------------------------------------------------------- #
# Wrapper
# --------------------------------------------------------------------------- #
def mlp_predictor(x_i, x_j, weights, biases, *, tile_n=None, max_tile_n=4096,
                  compute_dtype=None, interpret=False):
    """Pallas implementation of MLPPredictor.forward (eval mode).

    x_i, x_j : (N, in_channels)
    weights  : list of (C_in, C_out) arrays (transposed vs torch.nn.Linear)
    biases   : list of (C_out,) arrays
    returns  : (N, out_channels)
    """
    N, in_channels = x_i.shape
    assert x_j.shape == x_i.shape
    num_layers = len(weights)
    assert num_layers >= 1 and len(biases) == num_layers
    out_channels = weights[-1].shape[1]
    out_dtype = x_i.dtype

    act_dtype = jnp.dtype(compute_dtype) if compute_dtype is not None \
        else jnp.dtype(x_i.dtype)
    lane_dense_out = (out_channels == 1)

    # ---- wrapper-side parameter prep (cast once, biases as f32 rows) -------
    ws = [jnp.asarray(w).astype(act_dtype) for w in weights]
    bs = [jnp.asarray(b).astype(jnp.float32).reshape(1, -1) for b in biases]
    if lane_dense_out:
        # Final weight passed pre-transposed as a (1, C_last) row.
        ws[-1] = ws[-1].reshape(1, -1)

    # ---- tile sizing driven by per-generation VMEM + megacore --------------
    in_item = jnp.dtype(x_i.dtype).itemsize
    out_item = jnp.dtype(out_dtype).itemsize
    act_item = act_dtype.itemsize
    max_width = max([in_channels] + [w.shape[1] for w in weights])
    out_cols = 1 if lane_dense_out else out_channels

    param_bytes = sum(w.size * act_item for w in ws) + sum(b.size * 4 for b in bs)
    per_row = 2 * 2 * in_channels * in_item      # x_i, x_j double-buffered
    per_row += 2 * out_cols * out_item           # output block double-buffered
    per_row += 3 * max_width * 4                 # live f32 activations (rough)

    vmem_cap = _vmem_capacity_bytes()
    budget = vmem_cap // 2                       # leave headroom
    rows_cap = max(128, (budget - 2 * param_bytes) // max(per_row, 1))

    cores = _tensorcores_per_chip()
    min_steps = 2 if (cores >= 2 and N > 128) else 1   # keep both v7x TCs busy

    if tile_n is None:
        t = min(max_tile_n, rows_cap, pl.cdiv(N, min_steps))
        tile_n = max(128, (t // 128) * 128)
    assert tile_n % 128 == 0 and tile_n > 0, "tile_n must be a multiple of 128"

    # ---- pad N to a tile multiple (no giant-single-block fallback) ---------
    n_pad = pl.cdiv(N, tile_n) * tile_n
    if n_pad != N:
        pad = n_pad - N
        x_i = jnp.pad(x_i, ((0, pad), (0, 0)))
        x_j = jnp.pad(x_j, ((0, pad), (0, 0)))
    grid = (n_pad // tile_n,)

    # ---- specs --------------------------------------------------------------
    x_spec = pl.BlockSpec((tile_n, in_channels), lambda i: (i, 0))

    params, param_specs = [], []
    for w, b in zip(ws, bs):
        param_specs.append(_const_param_spec(w.shape))
        param_specs.append(_const_param_spec(b.shape))
        params.append(w)
        params.append(b)

    if lane_dense_out:
        out_shape = jax.ShapeDtypeStruct((1, n_pad), out_dtype)
        out_spec = pl.BlockSpec((1, tile_n), lambda i: (0, i))
    else:
        out_shape = jax.ShapeDtypeStruct((n_pad, out_channels), out_dtype)
        out_spec = pl.BlockSpec((tile_n, out_channels), lambda i: (i, 0))

    # ---- explicit VMEM budget & advisory cost estimate ---------------------
    needed = per_row * tile_n + 2 * param_bytes + (1 << 20)
    vmem_limit = int(min(max(2 * needed, 8 << 20), int(0.9 * vmem_cap)))

    flops = 2 * n_pad * sum(w.shape[0] * w.shape[1] for w in weights)
    bytes_accessed = int(
        2 * N * in_channels * in_item
        + N * out_channels * out_item
        + param_bytes)

    kernel = _make_mlp_kernel(num_layers, lane_dense_out, act_dtype)

    out = pl.pallas_call(
        kernel,
        out_shape=out_shape,
        grid_spec=pltpu.PrefetchScalarGridSpec(
            num_scalar_prefetch=0,
            grid=grid,
            in_specs=[x_spec, x_spec] + param_specs,
            out_specs=out_spec,
        ),
        compiler_params=pltpu.CompilerParams(
            dimension_semantics=("parallel",),
            vmem_limit_bytes=vmem_limit,
        ),
        cost_estimate=pl.CostEstimate(
            flops=flops, transcendentals=0, bytes_accessed=bytes_accessed),
        interpret=interpret,
    )(x_i, x_j, *params)

    if lane_dense_out:
        out = out.reshape(n_pad, 1)[:N]
    else:
        out = out[:N]
    return out


# --------------------------------------------------------------------------- #
# Reference & demo
# --------------------------------------------------------------------------- #
def _torch_style_linear_init(key, fan_in, fan_out):
    """torch.nn.Linear default init; weight stored as (fan_in, fan_out)."""
    kw, kb = jax.random.split(key)
    bound = 1.0 / math.sqrt(fan_in)
    w = jax.random.uniform(kw, (fan_in, fan_out), jnp.float32, -bound, bound)
    b = jax.random.uniform(kb, (fan_out,), jnp.float32, -bound, bound)
    return w, b


def reference_forward(x_i, x_j, weights, biases):
    x = x_i * x_j
    last = len(weights) - 1
    for l, (w, b) in enumerate(zip(weights, biases)):
        x = x @ w + b
        if l < last:
            x = jnp.maximum(x, 0.0)
    return x


if __name__ == "__main__":
    # Small config consistent with the module (link-prediction head).
    in_channels = 16
    hidden_channels = 32
    out_channels = 1
    num_layers = 3
    dropout = 0.5        # unused in eval mode
    N = 256              # number of node pairs

    key = jax.random.PRNGKey(0)
    k_xi, k_xj, *k_layers = jax.random.split(key, 2 + num_layers)

    x_i = jax.random.normal(k_xi, (N, in_channels), jnp.float32)
    x_j = jax.random.normal(k_xj, (N, in_channels), jnp.float32)

    weights, biases = [], []
    for l in range(num_layers):
        fan_in = in_channels if l == 0 else hidden_channels
        fan_out = out_channels if l == num_layers - 1 else hidden_channels
        w, b = _torch_style_linear_init(k_layers[l], fan_in, fan_out)
        weights.append(w)
        biases.append(b)

    out = mlp_predictor(x_i, x_j, weights, biases)
    out = jax.block_until_ready(out)

    ref = reference_forward(x_i, x_j, weights, biases)
    assert out.shape == (N, out_channels), out.shape
    assert jnp.allclose(out, ref, rtol=1e-5, atol=1e-5), "mismatch vs reference"

    print("KERNEL_OK")
</pallas_src>

<mosaic_0001>
module attributes {stable_mosaic.version = 11 : i64} {
  func.func @kernel(%arg0: i32, %arg1: memref<256x16xf32, #tpu.memory_space<vmem>>, %arg2: memref<256x16xf32, #tpu.memory_space<vmem>>, %arg3: memref<16x32xf32, #tpu.memory_space<vmem>>, %arg4: memref<1x32xf32, #tpu.memory_space<vmem>>, %arg5: memref<32x32xf32, #tpu.memory_space<vmem>>, %arg6: memref<1x32xf32, #tpu.memory_space<vmem>>, %arg7: memref<1x32xf32, #tpu.memory_space<vmem>>, %arg8: memref<1x1xf32, #tpu.memory_space<vmem>>, %arg9: memref<1x256xf32, #tpu.memory_space<vmem>>) attributes {dimension_semantics = [#tpu.dimension_semantics<parallel>], iteration_bounds = array<i64: 1>, scalar_prefetch = 0 : i64, scratch_operands = 0 : i64, tpu.core_type = #tpu.core_type<tc>, window_params = [{transform_indices = @transform_0, window_bounds = array<i64: 256, 16>}, {transform_indices = @transform_1, window_bounds = array<i64: 256, 16>}, {pipeline_mode = #tpu.pipeline_mode<synchronous>, transform_indices = @transform_2, window_bounds = array<i64: 16, 32>}, {pipeline_mode = #tpu.pipeline_mode<synchronous>, transform_indices = @transform_3, window_bounds = array<i64: 1, 32>}, {pipeline_mode = #tpu.pipeline_mode<synchronous>, transform_indices = @transform_4, window_bounds = array<i64: 32, 32>}, {pipeline_mode = #tpu.pipeline_mode<synchronous>, transform_indices = @transform_5, window_bounds = array<i64: 1, 32>}, {pipeline_mode = #tpu.pipeline_mode<synchronous>, transform_indices = @transform_6, window_bounds = array<i64: 1, 32>}, {pipeline_mode = #tpu.pipeline_mode<synchronous>, transform_indices = @transform_7, window_bounds = array<i64: 1, 1>}, {transform_indices = @transform_8, window_bounds = array<i64: 1, 256>}]} {
    %c0 = arith.constant 0 : index
    %c0_0 = arith.constant 0 : index
    %0 = vector.load %arg1[%c0, %c0_0] : memref<256x16xf32, #tpu.memory_space<vmem>>, vector<256x16xf32>
    %c0_1 = arith.constant 0 : index
    %c0_2 = arith.constant 0 : index
    %1 = vector.load %arg2[%c0_1, %c0_2] : memref<256x16xf32, #tpu.memory_space<vmem>>, vector<256x16xf32>
    %2 = arith.mulf %0, %1 : vector<256x16xf32>
    %c0_3 = arith.constant 0 : index
    %c0_4 = arith.constant 0 : index
    %3 = vector.load %arg3[%c0_3, %c0_4] : memref<16x32xf32, #tpu.memory_space<vmem>>, vector<16x32xf32>
    %c0_5 = arith.constant 0 : index
    %c0_6 = arith.constant 0 : index
    %4 = vector.load %arg4[%c0_5, %c0_6] : memref<1x32xf32, #tpu.memory_space<vmem>>, vector<1x32xf32>
    %cst = arith.constant dense<0.000000e+00> : vector<256x32xf32>
    %5 = tpu.matmul %2, %3, %cst {dimension_numbers = #tpu.dot_dimension_numbers<[1], [0], [0], [1], [0, 0, 1, 1], [], []>} : vector<256x16xf32>, vector<16x32xf32>, vector<256x32xf32> -> vector<256x32xf32>
    %6 = vector.broadcast %4 : vector<1x32xf32> to vector<256x32xf32>
    %7 = arith.addf %5, %6 : vector<256x32xf32>
    %cst_7 = arith.constant 0.000000e+00 : f32
    %8 = vector.broadcast %cst_7 : f32 to vector<256x32xf32>
    %9 = arith.maximumf %7, %8 : vector<256x32xf32>
    %c0_8 = arith.constant 0 : index
    %c0_9 = arith.constant 0 : index
    %10 = vector.load %arg5[%c0_8, %c0_9] : memref<32x32xf32, #tpu.memory_space<vmem>>, vector<32x32xf32>
    %c0_10 = arith.constant 0 : index
    %c0_11 = arith.constant 0 : index
    %11 = vector.load %arg6[%c0_10, %c0_11] : memref<1x32xf32, #tpu.memory_space<vmem>>, vector<1x32xf32>
    %cst_12 = arith.constant dense<0.000000e+00> : vector<256x32xf32>
    %12 = tpu.matmul %9, %10, %cst_12 {dimension_numbers = #tpu.dot_dimension_numbers<[1], [0], [0], [1], [0, 0, 1, 1], [], []>} : vector<256x32xf32>, vector<32x32xf32>, vector<256x32xf32> -> vector<256x32xf32>
    %13 = vector.broadcast %11 : vector<1x32xf32> to vector<256x32xf32>
    %14 = arith.addf %12, %13 : vector<256x32xf32>
    %cst_13 = arith.constant 0.000000e+00 : f32
    %15 = vector.broadcast %cst_13 : f32 to vector<256x32xf32>
    %16 = arith.maximumf %14, %15 : vector<256x32xf32>
    %c0_14 = arith.constant 0 : index
    %c0_15 = arith.constant 0 : index
    %17 = vector.load %arg7[%c0_14, %c0_15] : memref<1x32xf32, #tpu.memory_space<vmem>>, vector<1x32xf32>
    %cst_16 = arith.constant dense<0.000000e+00> : vector<1x256xf32>
    %18 = tpu.matmul %17, %16, %cst_16 {dimension_numbers = #tpu.dot_dimension_numbers<[1], [1], [0], [0], [0, 0, 1, 0], [], []>} : vector<1x32xf32>, vector<256x32xf32>, vector<1x256xf32> -> vector<1x256xf32>
    %c0_17 = arith.constant 0 : index
    %c0_18 = arith.constant 0 : index
    %19 = vector.load %arg8[%c0_17, %c0_18] : memref<1x1xf32, #tpu.memory_space<vmem>>, vector<1x1xf32>
    %20 = vector.broadcast %19 : vector<1x1xf32> to vector<1x256xf32>
    %21 = arith.addf %18, %20 : vector<1x256xf32>
    %c0_19 = arith.constant 0 : index
    %c0_20 = arith.constant 0 : index
    %22 = vector.load %arg9[%c0_19, %c0_20] : memref<1x256xf32, #tpu.memory_space<vmem>>, vector<1x256xf32>
    tpu.vector_store %arg9[%c0_19, %c0_20], %21 {strides = array<i32>} : memref<1x256xf32, #tpu.memory_space<vmem>>, vector<1x256xf32>,
    return
  }
  func.func @transform_0(%arg0: i32) -> (i32, i32) {
    %c0_i32 = arith.constant 0 : i32
    %c0_i32_0 = arith.constant 0 : i32
    return %arg0, %c0_i32 : i32, i32
  }
  func.func @transform_1(%arg0: i32) -> (i32, i32) {
    %c0_i32 = arith.constant 0 : i32
    %c0_i32_0 = arith.constant 0 : i32
    return %arg0, %c0_i32 : i32, i32
  }
  func.func @transform_2(%arg0: i32) -> (i32, i32) {
    %c0_i32 = arith.constant 0 : i32
    %c0_i32_0 = arith.constant 0 : i32
    %c0_i32_1 = arith.constant 0 : i32
    return %c0_i32, %c0_i32_0 : i32, i32
  }
  func.func @transform_3(%arg0: i32) -> (i32, i32) {
    %c0_i32 = arith.constant 0 : i32
    %c0_i32_0 = arith.constant 0 : i32
    %c0_i32_1 = arith.constant 0 : i32
    return %c0_i32, %c0_i32_0 : i32, i32
  }
  func.func @transform_4(%arg0: i32) -> (i32, i32) {
    %c0_i32 = arith.constant 0 : i32
    %c0_i32_0 = arith.constant 0 : i32
    %c0_i32_1 = arith.constant 0 : i32
    return %c0_i32, %c0_i32_0 : i32, i32
  }
  func.func @transform_5(%arg0: i32) -> (i32, i32) {
    %c0_i32 = arith.constant 0 : i32
    %c0_i32_0 = arith.constant 0 : i32
    %c0_i32_1 = arith.constant 0 : i32
    return %c0_i32, %c0_i32_0 : i32, i32
  }
  func.func @transform_6(%arg0: i32) -> (i32, i32) {
    %c0_i32 = arith.constant 0 : i32
    %c0_i32_0 = arith.constant 0 : i32
    %c0_i32_1 = arith.constant 0 : i32
    return %c0_i32, %c0_i32_0 : i32, i32
  }
  func.func @transform_7(%arg0: i32) -> (i32, i32) {
    %c0_i32 = arith.constant 0 : i32
    %c0_i32_0 = arith.constant 0 : i32
    %c0_i32_1 = arith.constant 0 : i32
    return %c0_i32, %c0_i32_0 : i32, i32
  }
  func.func @transform_8(%arg0: i32) -> (i32, i32) {
    %c0_i32 = arith.constant 0 : i32
    %c0_i32_0 = arith.constant 0 : i32
    return %c0_i32, %arg0 : i32, i32
  }
}

</mosaic_0001>

<llo_original>
// kernel: tpu_custom_call.1
$region0: #{tpu_custom_call.1}
  #allocation0 [shape = 'u32[]', space=smem, size = 0x4, offset = 0x4, fixed_abs, tag = 'smem constant byte address 0x4 - core index']
  #allocation1 [shape = 'u32[72,128]{1,0:T(1,128)}', space=vmem, size = 0x9000, scoped, tag = 'internal scratch']
  #allocation2 [shape = 'f32[1,1]{1,0:T(1,128)S(1)}', space=vmem, size = 0x200, scoped, tag = 'scoped memory for tpu_custom_call.1']
  %s0 = inlined_call_operand.vmem [shape: f32[256,16], index: 0, kind: input, shape index: {}]
  %s1 = inlined_call_operand.vmem [shape: f32[256,16], index: 1, kind: input, shape index: {}]
  %s2 = inlined_call_operand.vmem [shape: f32[16,32], index: 2, kind: input, shape index: {}]
  %s3 = inlined_call_operand.vmem [shape: f32[1,32], index: 3, kind: input, shape index: {}]
  %s4 = inlined_call_operand.vmem [shape: f32[32,32], index: 4, kind: input, shape index: {}]
  %s5 = inlined_call_operand.vmem [shape: f32[1,32], index: 5, kind: input, shape index: {}]
  %s6 = inlined_call_operand.vmem [shape: f32[1,32], index: 6, kind: input, shape index: {}]
  %s7 = inlined_call_operand.<no memory space> [shape: f32[1,1], index: 7, kind: input, shape index: {}]
  %s8 = inlined_call_operand.hbm [shape: f32[1,256], index: 8, kind: output, shape index: {}]
  %s9 = sld [smem:[#allocation0]]
  $region42: #{tpu_custom_call.1} parent=0
    _
  %s11 = ssub.s32 1, %s9
  %s12 = scalar_select 0, %s11, %s9
  %v13 = vstv %s7
  %14 = vst [vmem:[#allocation2] sm:$0x1] %v13
  $region1: #{tpu_custom_call.1} parent=0
    #allocation3 [shape = 'u8[1024]{0}', space=vmem, size = 0x400, scoped, tag = 'output window, operand 0, single buffered']
    #allocation4 [shape = 's32[1]{0}', space=sflag, size = 0x4, scoped, tag = 'scoped memory for tpu_custom_call.1']
    %15 = vsyncpa [#allocation4], 0
    // Predicated region
    $region2: #{tpu_custom_call.1} parent=1 // pred_check
      _
    $region3: #{tpu_custom_call.1} parent=1 // pred_check_branch
      %17 = sbr.rel (0) target = $region5
    $region4: #{tpu_custom_call.1} parent=1 // pred_region
      _
    $region5: #{tpu_custom_call.1} parent=1 // pred_fallthru
      _
    // Predicated region
    $region6: #{tpu_custom_call.1} parent=1 // pred_check
      _
    $region7: #{tpu_custom_call.1} parent=1 // pred_check_branch
      %19 = sbr.rel (0) target = $region9
    $region8: #{tpu_custom_call.1} parent=1 // pred_region
      _
    $region9: #{tpu_custom_call.1} parent=1 // pred_fallthru
      _
    // Predicated region
    $region10: #{tpu_custom_call.1} parent=1 // pred_check
      _
    $region11: #{tpu_custom_call.1} parent=1 // pred_check_branch
      %21 = sbr.rel (0) target = $region13
    $region12: #{tpu_custom_call.1} parent=1 // pred_region
      _
    $region13: #{tpu_custom_call.1} parent=1 // pred_fallthru
      _
    // Predicated region
    $region14: #{tpu_custom_call.1} parent=1 // pred_check
      _
    $region15: #{tpu_custom_call.1} parent=1 // pred_check_branch
      %23 = sbr.rel (0) target = $region17
    $region16: #{tpu_custom_call.1} parent=1 // pred_region
      _
    $region17: #{tpu_custom_call.1} parent=1 // pred_fallthru
      _
    // Predicated region
    $region18: #{tpu_custom_call.1} parent=1 // pred_check
      _
    $region19: #{tpu_custom_call.1} parent=1 // pred_check_branch
      %25 = sbr.rel (0) target = $region21
    $region20: #{tpu_custom_call.1} parent=1 // pred_region
      _
    $region21: #{tpu_custom_call.1} parent=1 // pred_fallthru
      _
    // Predicated region
    $region22: #{tpu_custom_call.1} parent=1 // pred_check
      _
    $region23: #{tpu_custom_call.1} parent=1 // pred_check_branch
      %27 = sbr.rel (0) target = $region25
    $region24: #{tpu_custom_call.1} parent=1 // pred_region
      _
    $region25: #{tpu_custom_call.1} parent=1 // pred_fallthru
      _
    // Predicated region
    $region26: #{tpu_custom_call.1} parent=1 // pred_check
      _
    $region27: #{tpu_custom_call.1} parent=1 // pred_check_branch
      %29 = sbr.rel (0) target = $region29
    $region28: #{tpu_custom_call.1} parent=1 // pred_region
      _
    $region29: #{tpu_custom_call.1} parent=1 // pred_fallthru
      _
    // Predicated region
    $region30: #{tpu_custom_call.1} parent=1 // pred_check
      _
    $region31: #{tpu_custom_call.1} parent=1 // pred_check_branch
      %31 = sbr.rel (0) target = $region33
    $region32: #{tpu_custom_call.1} parent=1 // pred_region
      _
    $region33: #{tpu_custom_call.1} parent=1 // pred_fallthru
      _
    %v32 = vld [vmem:[%s0] sm:$0xff]
    %v33 = vld [vmem:[%s0 + $0x8] sm:$0xff]
    %v34 = vld [vmem:[%s0 + $0x10] sm:$0xff]
    %v35 = vld [vmem:[%s0 + $0x18] sm:$0xff]
    %v36 = vld [vmem:[%s0 + $0x20] sm:$0xff]
    %v37 = vld [vmem:[%s0 + $0x28] sm:$0xff]
    %v38 = vld [vmem:[%s0 + $0x30] sm:$0xff]
    %v39 = vld [vmem:[%s0 + $0x38] sm:$0xff]
    %v40 = vld [vmem:[%s0 + $0x40] sm:$0xff]
    %v41 = vld [vmem:[%s0 + $0x48] sm:$0xff]
    %v42 = vld [vmem:[%s0 + $0x50] sm:$0xff]
    %v43 = vld [vmem:[%s0 + $0x58] sm:$0xff]
    %v44 = vld [vmem:[%s0 + $0x60] sm:$0xff]
    %v45 = vld [vmem:[%s0 + $0x68] sm:$0xff]
    %v46 = vld [vmem:[%s0 + $0x70] sm:$0xff]
    %v47 = vld [vmem:[%s0 + $0x78] sm:$0xff]
    %v48 = vld [vmem:[%s0 + $0x80] sm:$0xff]
    %v49 = vld [vmem:[%s0 + $0x88] sm:$0xff]
    %v50 = vld [vmem:[%s0 + $0x90] sm:$0xff]
    %v51 = vld [vmem:[%s0 + $0x98] sm:$0xff]
    %v52 = vld [vmem:[%s0 + $0xa0] sm:$0xff]
    %v53 = vld [vmem:[%s0 + $0xa8] sm:$0xff]
    %v54 = vld [vmem:[%s0 + $0xb0] sm:$0xff]
    %v55 = vld [vmem:[%s0 + $0xb8] sm:$0xff]
    %v56 = vld [vmem:[%s0 + $0xc0] sm:$0xff]
    %v57 = vld [vmem:[%s0 + $0xc8] sm:$0xff]
    %v58 = vld [vmem:[%s0 + $0xd0] sm:$0xff]
    %v59 = vld [vmem:[%s0 + $0xd8] sm:$0xff]
    %v60 = vld [vmem:[%s0 + $0xe0] sm:$0xff]
    %v61 = vld [vmem:[%s0 + $0xe8] sm:$0xff]
    %v62 = vld [vmem:[%s0 + $0xf0] sm:$0xff]
    %v63 = vld [vmem:[%s0 + $0xf8] sm:$0xff]
    %v64 = vld [vmem:[%s1] sm:$0xff]
    %v65 = vld [vmem:[%s1 + $0x8] sm:$0xff]
    %v66 = vld [vmem:[%s1 + $0x10] sm:$0xff]
    %v67 = vld [vmem:[%s1 + $0x18] sm:$0xff]
    %v68 = vld [vmem:[%s1 + $0x20] sm:$0xff]
    %v69 = vld [vmem:[%s1 + $0x28] sm:$0xff]
    %v70 = vld [vmem:[%s1 + $0x30] sm:$0xff]
    %v71 = vld [vmem:[%s1 + $0x38] sm:$0xff]
    %v72 = vld [vmem:[%s1 + $0x40] sm:$0xff]
    %v73 = vld [vmem:[%s1 + $0x48] sm:$0xff]
    %v74 = vld [vmem:[%s1 + $0x50] sm:$0xff]
    %v75 = vld [vmem:[%s1 + $0x58] sm:$0xff]
    %v76 = vld [vmem:[%s1 + $0x60] sm:$0xff]
    %v77 = vld [vmem:[%s1 + $0x68] sm:$0xff]
    %v78 = vld [vmem:[%s1 + $0x70] sm:$0xff]
    %v79 = vld [vmem:[%s1 + $0x78] sm:$0xff]
    %v80 = vld [vmem:[%s1 + $0x80] sm:$0xff]
    %v81 = vld [vmem:[%s1 + $0x88] sm:$0xff]
    %v82 = vld [vmem:[%s1 + $0x90] sm:$0xff]
    %v83 = vld [vmem:[%s1 + $0x98] sm:$0xff]
    %v84 = vld [vmem:[%s1 + $0xa0] sm:$0xff]
    %v85 = vld [vmem:[%s1 + $0xa8] sm:$0xff]
    %v86 = vld [vmem:[%s1 + $0xb0] sm:$0xff]
    %v87 = vld [vmem:[%s1 + $0xb8] sm:$0xff]
    %v88 = vld [vmem:[%s1 + $0xc0] sm:$0xff]
    %v89 = vld [vmem:[%s1 + $0xc8] sm:$0xff]
    %v90 = vld [vmem:[%s1 + $0xd0] sm:$0xff]
    %v91 = vld [vmem:[%s1 + $0xd8] sm:$0xff]
    %v92 = vld [vmem:[%s1 + $0xe0] sm:$0xff]
    %v93 = vld [vmem:[%s1 + $0xe8] sm:$0xff]
    %v94 = vld [vmem:[%s1 + $0xf0] sm:$0xff]
    %v95 = vld [vmem:[%s1 + $0xf8] sm:$0xff]
    %v96 = vmul.f32 %v32, %v64
    %v97 = vmul.f32 %v33, %v65
    %v98 = vmul.f32 %v34, %v66
    %v99 = vmul.f32 %v35, %v67
    %v100 = vmul.f32 %v36, %v68
    %v101 = vmul.f32 %v37, %v69
    %v102 = vmul.f32 %v38, %v70
    %v103 = vmul.f32 %v39, %v71
    %v104 = vmul.f32 %v40, %v72
    %v105 = vmul.f32 %v41, %v73
    %v106 = vmul.f32 %v42, %v74
    %v107 = vmul.f32 %v43, %v75
    %v108 = vmul.f32 %v44, %v76
    %v109 = vmul.f32 %v45, %v77
    %v110 = vmul.f32 %v46, %v78
    %v111 = vmul.f32 %v47, %v79
    %v112 = vmul.f32 %v48, %v80
    %v113 = vmul.f32 %v49, %v81
    %v114 = vmul.f32 %v50, %v82
    %v115 = vmul.f32 %v51, %v83
    %v116 = vmul.f32 %v52, %v84
    %v117 = vmul.f32 %v53, %v85
    %v118 = vmul.f32 %v54, %v86
    %v119 = vmul.f32 %v55, %v87
    %v120 = vmul.f32 %v56, %v88
    %v121 = vmul.f32 %v57, %v89
    %v122 = vmul.f32 %v58, %v90
    %v123 = vmul.f32 %v59, %v91
    %v124 = vmul.f32 %v60, %v92
    %v125 = vmul.f32 %v61, %v93
    %v126 = vmul.f32 %v62, %v94
    %v127 = vmul.f32 %v63, %v95
    %v128 = vld [vmem:[%s2] sm:$0xff]
    %v129 = vld [vmem:[%s2 + $0x8] sm:$0xff]
    %v130 = vld [vmem:[%s3] sm:$0x1]
    %v132 = vperm.slane %v130, 0
    %vm134 = vcmask 130048
    %v136 = vsel %vm134, %v96, 0
    %v139 = vsel %vm134, %v97, 0
    %v142 = vsel %vm134, %v98, 0
    %v145 = vsel %vm134, %v99, 0
    %v148 = vsel %vm134, %v100, 0
    %v151 = vsel %vm134, %v101, 0
    %v154 = vsel %vm134, %v102, 0
    %v157 = vsel %vm134, %v103, 0
    %v160 = vsel %vm134, %v104, 0
    %v163 = vsel %vm134, %v105, 0
    %v166 = vsel %vm134, %v106, 0
    %v169 = vsel %vm134, %v107, 0
    %v172 = vsel %vm134, %v108, 0
    %v175 = vsel %vm134, %v109, 0
    %v178 = vsel %vm134, %v110, 0
    %v181 = vsel %vm134, %v111, 0
    %v184 = vsel %vm134, %v112, 0
    %v187 = vsel %vm134, %v113, 0
    %v190 = vsel %vm134, %v114, 0
    %v193 = vsel %vm134, %v115, 0
    %v196 = vsel %vm134, %v116, 0
    %v199 = vsel %vm134, %v117, 0
    %v202 = vsel %vm134, %v118, 0
    %v205 = vsel %vm134, %v119, 0
    %v208 = vsel %vm134, %v120, 0
    %v211 = vsel %vm134, %v121, 0
    %v214 = vsel %vm134, %v122, 0
    %v217 = vsel %vm134, %v123, 0
    %v220 = vsel %vm134, %v124, 0
    %v223 = vsel %vm134, %v125, 0
    %v226 = vsel %vm134, %v126, 0
    %v229 = vsel %vm134, %v127, 0
    %231 = vmatpush.msra.mxu0 0.0
    %232 = vmatpush.msra.mxu0 0.0
    %233 = vmatpush.msra.mxu0 0.0
    %234 = vmatpush.msra.mxu0 0.0
    %235 = vmatpush.msra.mxu0 0.0
    %236 = vmatpush.msra.mxu0 0.0
    %237 = vmatpush.msra.mxu0 0.0
    %238 = vmatpush.msra.mxu0 0.0
    %239 = vmatpush.msra.mxu0 0.0
    %240 = vmatpush.msra.mxu0 0.0
    %241 = vmatpush.msra.mxu0 0.0
    %242 = vmatpush.msra.mxu0 0.0
    %243 = vmatpush.msra.mxu0 0.0
    %244 = vmatpush.msra.mxu0 0.0
    %245 = vmatpush.msra.mxu0 %v129
    %246 = vmatpush.msra.mxu0 %v128
    %247 = vmatmul.f32.gmra.mxu0 %v136
    %v248 = vpop.f32.mrf.mxu0
    %v249 = vadd.f32 %v132, %v248
    %250 = vmatmul.f32.gmra.mxu0 %v139
    %v251 = vpop.f32.mrf.mxu0
    %v252 = vadd.f32 %v132, %v251
    %253 = vmatmul.f32.gmra.mxu0 %v142
    %v254 = vpop.f32.mrf.mxu0
    %v255 = vadd.f32 %v132, %v254
    %256 = vmatmul.f32.gmra.mxu0 %v145
    %v257 = vpop.f32.mrf.mxu0
    %v258 = vadd.f32 %v132, %v257
    %259 = vmatmul.f32.gmra.mxu0 %v148
    %v260 = vpop.f32.mrf.mxu0
    %v261 = vadd.f32 %v132, %v260
    %262 = vmatmul.f32.gmra.mxu0 %v151
    %v263 = vpop.f32.mrf.mxu0
    %v264 = vadd.f32 %v132, %v263
    %265 = vmatmul.f32.gmra.mxu0 %v154
    %v266 = vpop.f32.mrf.mxu0
    %v267 = vadd.f32 %v132, %v266
    %268 = vmatmul.f32.gmra.mxu0 %v157
    %v269 = vpop.f32.mrf.mxu0
    %v270 = vadd.f32 %v132, %v269
    %271 = vmatmul.f32.gmra.mxu0 %v160
    %v272 = vpop.f32.mrf.mxu0
    %v273 = vadd.f32 %v132, %v272
    %274 = vmatmul.f32.gmra.mxu0 %v163
    %v275 = vpop.f32.mrf.mxu0
    %v276 = vadd.f32 %v132, %v275
    %277 = vmatmul.f32.gmra.mxu0 %v166
    %v278 = vpop.f32.mrf.mxu0
    %v279 = vadd.f32 %v132, %v278
    %280 = vmatmul.f32.gmra.mxu0 %v169
    %v281 = vpop.f32.mrf.mxu0
    %v282 = vadd.f32 %v132, %v281
    %283 = vmatmul.f32.gmra.mxu0 %v172
    %v284 = vpop.f32.mrf.mxu0
    %v285 = vadd.f32 %v132, %v284
    %286 = vmatmul.f32.gmra.mxu0 %v175
    %v287 = vpop.f32.mrf.mxu0
    %v288 = vadd.f32 %v132, %v287
    %289 = vmatmul.f32.gmra.mxu0 %v178
    %v290 = vpop.f32.mrf.mxu0
    %v291 = vadd.f32 %v132, %v290
    %292 = vmatmul.f32.gmra.mxu0 %v181
    %v293 = vpop.f32.mrf.mxu0
    %v294 = vadd.f32 %v132, %v293
    %295 = vmatmul.f32.gmra.mxu0 %v184
    %v296 = vpop.f32.mrf.mxu0
    %v297 = vadd.f32 %v132, %v296
    %298 = vmatmul.f32.gmra.mxu0 %v187
    %v299 = vpop.f32.mrf.mxu0
    %v300 = vadd.f32 %v132, %v299
    %301 = vmatmul.f32.gmra.mxu0 %v190
    %v302 = vpop.f32.mrf.mxu0
    %v303 = vadd.f32 %v132, %v302
    %304 = vmatmul.f32.gmra.mxu0 %v193
    %v305 = vpop.f32.mrf.mxu0
    %v306 = vadd.f32 %v132, %v305
    %307 = vmatmul.f32.gmra.mxu0 %v196
    %v308 = vpop.f32.mrf.mxu0
    %v309 = vadd.f32 %v132, %v308
    %310 = vmatmul.f32.gmra.mxu0 %v199
    %v311 = vpop.f32.mrf.mxu0
    %v312 = vadd.f32 %v132, %v311
    %313 = vmatmul.f32.gmra.mxu0 %v202
    %v314 = vpop.f32.mrf.mxu0
    %v315 = vadd.f32 %v132, %v314
    %316 = vmatmul.f32.gmra.mxu0 %v205
    %v317 = vpop.f32.mrf.mxu0
    %v318 = vadd.f32 %v132, %v317
    %319 = vmatmul.f32.gmra.mxu0 %v208
    %v320 = vpop.f32.mrf.mxu0
    %v321 = vadd.f32 %v132, %v320
    %322 = vmatmul.f32.gmra.mxu0 %v211
    %v323 = vpop.f32.mrf.mxu0
    %v324 = vadd.f32 %v132, %v323
    %325 = vmatmul.f32.gmra.mxu0 %v214
    %v326 = vpop.f32.mrf.mxu0
    %v327 = vadd.f32 %v132, %v326
    %328 = vmatmul.f32.gmra.mxu0 %v217
    %v329 = vpop.f32.mrf.mxu0
    %v330 = vadd.f32 %v132, %v329
    %331 = vmatmul.f32.gmra.mxu0 %v220
    %v332 = vpop.f32.mrf.mxu0
    %v333 = vadd.f32 %v132, %v332
    %334 = vmatmul.f32.gmra.mxu0 %v223
    %v335 = vpop.f32.mrf.mxu0
    %v336 = vadd.f32 %v132, %v335
    %337 = vmatmul.f32.gmra.mxu0 %v226
    %v338 = vpop.f32.mrf.mxu0
    %v339 = vadd.f32 %v132, %v338
    %340 = vmatmul.f32.gmra.mxu0 %v229
    %v341 = vpop.f32.mrf.mxu0
    %v342 = vadd.f32 %v132, %v341
    %343 = vdwg.mxu0
    %v344 = vmax.f32 %v249, 0.0
    %v345 = vmax.f32 %v252, 0.0
    %v346 = vmax.f32 %v255, 0.0
    %v347 = vmax.f32 %v258, 0.0
    %v348 = vmax.f32 %v261, 0.0
    %v349 = vmax.f32 %v264, 0.0
    %v350 = vmax.f32 %v267, 0.0
    %v351 = vmax.f32 %v270, 0.0
    %v352 = vmax.f32 %v273, 0.0
    %v353 = vmax.f32 %v276, 0.0
    %v354 = vmax.f32 %v279, 0.0
    %v355 = vmax.f32 %v282, 0.0
    %v356 = vmax.f32 %v285, 0.0
    %v357 = vmax.f32 %v288, 0.0
    %v358 = vmax.f32 %v291, 0.0
    %v359 = vmax.f32 %v294, 0.0
    %v360 = vmax.f32 %v297, 0.0
    %v361 = vmax.f32 %v300, 0.0
    %v362 = vmax.f32 %v303, 0.0
    %v363 = vmax.f32 %v306, 0.0
    %v364 = vmax.f32 %v309, 0.0
    %v365 = vmax.f32 %v312, 0.0
    %v366 = vmax.f32 %v315, 0.0
    %v367 = vmax.f32 %v318, 0.0
    %v368 = vmax.f32 %v321, 0.0
    %v369 = vmax.f32 %v324, 0.0
    %v370 = vmax.f32 %v327, 0.0
    %v371 = vmax.f32 %v330, 0.0
    %v372 = vmax.f32 %v333, 0.0
    %v373 = vmax.f32 %v336, 0.0
    %v374 = vmax.f32 %v339, 0.0
    %v375 = vmax.f32 %v342, 0.0
    %v376 = vld [vmem:[%s4] sm:$0xff]
    %v377 = vld [vmem:[%s4 + $0x8] sm:$0xff]
    %v378 = vld [vmem:[%s4 + $0x10] sm:$0xff]
    %v379 = vld [vmem:[%s4 + $0x18] sm:$0xff]
    %v380 = vld [vmem:[%s5] sm:$0x1]
    %v382 = vperm.slane %v380, 0
    %vm384 = vcmask 261120
    %v386 = vsel %vm384, %v344, 0
    %v389 = vsel %vm384, %v345, 0
    %v392 = vsel %vm384, %v346, 0
    %v395 = vsel %vm384, %v347, 0
    %v398 = vsel %vm384, %v348, 0
    %v401 = vsel %vm384, %v349, 0
    %v404 = vsel %vm384, %v350, 0
    %v407 = vsel %vm384, %v351, 0
    %v410 = vsel %vm384, %v352, 0
    %v413 = vsel %vm384, %v353, 0
    %v416 = vsel %vm384, %v354, 0
    %v419 = vsel %vm384, %v355, 0
    %v422 = vsel %vm384, %v356, 0
    %v425 = vsel %vm384, %v357, 0
    %v428 = vsel %vm384, %v358, 0
    %v431 = vsel %vm384, %v359, 0
    %v434 = vsel %vm384, %v360, 0
    %v437 = vsel %vm384, %v361, 0
    %v440 = vsel %vm384, %v362, 0
    %v443 = vsel %vm384, %v363, 0
    %v446 = vsel %vm384, %v364, 0
    %v449 = vsel %vm384, %v365, 0
    %v452 = vsel %vm384, %v366, 0
    %v455 = vsel %vm384, %v367, 0
    %v458 = vsel %vm384, %v368, 0
    %v461 = vsel %vm384, %v369, 0
    %v464 = vsel %vm384, %v370, 0
    %v467 = vsel %vm384, %v371, 0
    %v470 = vsel %vm384, %v372, 0
    %v473 = vsel %vm384, %v373, 0
    %v476 = vsel %vm384, %v374, 0
    %v479 = vsel %vm384, %v375, 0
    %481 = vmatpush.msra.mxu0 0.0
    %482 = vmatpush.msra.mxu0 0.0
    %483 = vmatpush.msra.mxu0 0.0
    %484 = vmatpush.msra.mxu0 0.0
    %485 = vmatpush.msra.mxu0 0.0
    %486 = vmatpush.msra.mxu0 0.0
    %487 = vmatpush.msra.mxu0 0.0
    %488 = vmatpush.msra.mxu0 0.0
    %489 = vmatpush.msra.mxu0 0.0
    %490 = vmatpush.msra.mxu0 0.0
    %491 = vmatpush.msra.mxu0 0.0
    %492 = vmatpush.msra.mxu0 0.0
    %493 = vmatpush.msra.mxu0 %v379
    %494 = vmatpush.msra.mxu0 %v378
    %495 = vmatpush.msra.mxu0 %v377
    %496 = vmatpush.msra.mxu0 %v376
    %497 = vmatmul.f32.gmra.mxu0 %v386
    %v498 = vpop.f32.mrf.mxu0
    %v499 = vadd.f32 %v382, %v498
    %500 = vmatmul.f32.gmra.mxu0 %v389
    %v501 = vpop.f32.mrf.mxu0
    %v502 = vadd.f32 %v382, %v501
    %503 = vmatmul.f32.gmra.mxu0 %v392
    %v504 = vpop.f32.mrf.mxu0
    %v505 = vadd.f32 %v382, %v504
    %506 = vmatmul.f32.gmra.mxu0 %v395
    %v507 = vpop.f32.mrf.mxu0
    %v508 = vadd.f32 %v382, %v507
    %509 = vmatmul.f32.gmra.mxu0 %v398
    %v510 = vpop.f32.mrf.mxu0
    %v511 = vadd.f32 %v382, %v510
    %512 = vmatmul.f32.gmra.mxu0 %v401
    %v513 = vpop.f32.mrf.mxu0
    %v514 = vadd.f32 %v382, %v513
    %515 = vmatmul.f32.gmra.mxu0 %v404
    %v516 = vpop.f32.mrf.mxu0
    %v517 = vadd.f32 %v382, %v516
    %518 = vmatmul.f32.gmra.mxu0 %v407
    %v519 = vpop.f32.mrf.mxu0
    %v520 = vadd.f32 %v382, %v519
    %521 = vmatmul.f32.gmra.mxu0 %v410
    %v522 = vpop.f32.mrf.mxu0
    %v523 = vadd.f32 %v382, %v522
    %524 = vmatmul.f32.gmra.mxu0 %v413
    %v525 = vpop.f32.mrf.mxu0
    %v526 = vadd.f32 %v382, %v525
    %527 = vmatmul.f32.gmra.mxu0 %v416
    %v528 = vpop.f32.mrf.mxu0
    %v529 = vadd.f32 %v382, %v528
    %530 = vmatmul.f32.gmra.mxu0 %v419
    %v531 = vpop.f32.mrf.mxu0
    %v532 = vadd.f32 %v382, %v531
    %533 = vmatmul.f32.gmra.mxu0 %v422
    %v534 = vpop.f32.mrf.mxu0
    %v535 = vadd.f32 %v382, %v534
    %536 = vmatmul.f32.gmra.mxu0 %v425
    %v537 = vpop.f32.mrf.mxu0
    %v538 = vadd.f32 %v382, %v537
    %539 = vmatmul.f32.gmra.mxu0 %v428
    %v540 = vpop.f32.mrf.mxu0
    %v541 = vadd.f32 %v382, %v540
    %542 = vmatmul.f32.gmra.mxu0 %v431
    %v543 = vpop.f32.mrf.mxu0
    %v544 = vadd.f32 %v382, %v543
    %545 = vmatmul.f32.gmra.mxu0 %v434
    %v546 = vpop.f32.mrf.mxu0
    %v547 = vadd.f32 %v382, %v546
    %548 = vmatmul.f32.gmra.mxu0 %v437
    %v549 = vpop.f32.mrf.mxu0
    %v550 = vadd.f32 %v382, %v549
    %551 = vmatmul.f32.gmra.mxu0 %v440
    %v552 = vpop.f32.mrf.mxu0
    %v553 = vadd.f32 %v382, %v552
    %554 = vmatmul.f32.gmra.mxu0 %v443
    %v555 = vpop.f32.mrf.mxu0
    %v556 = vadd.f32 %v382, %v555
    %557 = vmatmul.f32.gmra.mxu0 %v446
    %v558 = vpop.f32.mrf.mxu0
    %v559 = vadd.f32 %v382, %v558
    %560 = vmatmul.f32.gmra.mxu0 %v449
    %v561 = vpop.f32.mrf.mxu0
    %v562 = vadd.f32 %v382, %v561
    %563 = vmatmul.f32.gmra.mxu0 %v452
    %v564 = vpop.f32.mrf.mxu0
    %v565 = vadd.f32 %v382, %v564
    %566 = vmatmul.f32.gmra.mxu0 %v455
    %v567 = vpop.f32.mrf.mxu0
    %v568 = vadd.f32 %v382, %v567
    %569 = vmatmul.f32.gmra.mxu0 %v458
    %v570 = vpop.f32.mrf.mxu0
    %v571 = vadd.f32 %v382, %v570
    %572 = vmatmul.f32.gmra.mxu0 %v461
    %v573 = vpop.f32.mrf.mxu0
    %v574 = vadd.f32 %v382, %v573
    %575 = vmatmul.f32.gmra.mxu0 %v464
    %v576 = vpop.f32.mrf.mxu0
    %v577 = vadd.f32 %v382, %v576
    %578 = vmatmul.f32.gmra.mxu0 %v467
    %v579 = vpop.f32.mrf.mxu0
    %v580 = vadd.f32 %v382, %v579
    %581 = vmatmul.f32.gmra.mxu0 %v470
    %v582 = vpop.f32.mrf.mxu0
    %v583 = vadd.f32 %v382, %v582
    %584 = vmatmul.f32.gmra.mxu0 %v473
    %v585 = vpop.f32.mrf.mxu0
    %v586 = vadd.f32 %v382, %v585
    %587 = vmatmul.f32.gmra.mxu0 %v476
    %v588 = vpop.f32.mrf.mxu0
    %v589 = vadd.f32 %v382, %v588
    %590 = vmatmul.f32.gmra.mxu0 %v479
    %v591 = vpop.f32.mrf.mxu0
    %v592 = vadd.f32 %v382, %v591
    %593 = vdwg.mxu0
    %v594 = vmax.f32 %v499, 0.0
    %v595 = vmax.f32 %v502, 0.0
    %v596 = vmax.f32 %v505, 0.0
    %v597 = vmax.f32 %v508, 0.0
    %v598 = vmax.f32 %v511, 0.0
    %v599 = vmax.f32 %v514, 0.0
    %v600 = vmax.f32 %v517, 0.0
    %v601 = vmax.f32 %v520, 0.0
    %v602 = vmax.f32 %v523, 0.0
    %v603 = vmax.f32 %v526, 0.0
    %v604 = vmax.f32 %v529, 0.0
    %v605 = vmax.f32 %v532, 0.0
    %v606 = vmax.f32 %v535, 0.0
    %v607 = vmax.f32 %v538, 0.0
    %v608 = vmax.f32 %v541, 0.0
    %v609 = vmax.f32 %v544, 0.0
    %v610 = vmax.f32 %v547, 0.0
    %v611 = vmax.f32 %v550, 0.0
    %v612 = vmax.f32 %v553, 0.0
    %v613 = vmax.f32 %v556, 0.0
    %v614 = vmax.f32 %v559, 0.0
    %v615 = vmax.f32 %v562, 0.0
    %v616 = vmax.f32 %v565, 0.0
    %v617 = vmax.f32 %v568, 0.0
    %v618 = vmax.f32 %v571, 0.0
    %v619 = vmax.f32 %v574, 0.0
    %v620 = vmax.f32 %v577, 0.0
    %v621 = vmax.f32 %v580, 0.0
    %v622 = vmax.f32 %v583, 0.0
    %v623 = vmax.f32 %v586, 0.0
    %v624 = vmax.f32 %v589, 0.0
    %v625 = vmax.f32 %v592, 0.0
    %v626 = vld [vmem:[%s6] sm:$0x1]
    %v627 = vld [vmem:[#allocation2] sm:$0x1]
    %629 = vset.pattern.permute.xlu0 0
    %630 = vperm.xlu0 %629, %v627
    %v631 = vpop.permute.xlu0 %630
    %v633 = vperm.slane %v631, 0
    %v635 = vsel %vm384, %v626, 0
    %v638 = vsel %vm384, %v594, 0
    %v641 = vsel %vm384, %v595, 0
    %v644 = vsel %vm384, %v596, 0
    %v647 = vsel %vm384, %v597, 0
    %v650 = vsel %vm384, %v598, 0
    %v653 = vsel %vm384, %v599, 0
    %v656 = vsel %vm384, %v600, 0
    %v659 = vsel %vm384, %v601, 0
    %v662 = vsel %vm384, %v602, 0
    %v665 = vsel %vm384, %v603, 0
    %v668 = vsel %vm384, %v604, 0
    %v671 = vsel %vm384, %v605, 0
    %v674 = vsel %vm384, %v606, 0
    %v677 = vsel %vm384, %v607, 0
    %v680 = vsel %vm384, %v608, 0
    %v683 = vsel %vm384, %v609, 0
    %v686 = vsel %vm384, %v610, 0
    %v689 = vsel %vm384, %v611, 0
    %v692 = vsel %vm384, %v612, 0
    %v695 = vsel %vm384, %v613, 0
    %v698 = vsel %vm384, %v614, 0
    %v701 = vsel %vm384, %v615, 0
    %v704 = vsel %vm384, %v616, 0
    %v707 = vsel %vm384, %v617, 0
    %v710 = vsel %vm384, %v618, 0
    %v713 = vsel %vm384, %v619, 0
    %v716 = vsel %vm384, %v620, 0
    %v719 = vsel %vm384, %v621, 0
    %v722 = vsel %vm384, %v622, 0
    %v725 = vsel %vm384, %v623, 0
    %v728 = vsel %vm384, %v624, 0
    %v731 = vsel %vm384, %v625, 0
    %733 = vmatpush.xpose.msra.mxu0 %v683
    %734 = vmatpush.xpose.msra.mxu0 %v680
    %735 = vmatpush.xpose.msra.mxu0 %v677
    %736 = vmatpush.xpose.msra.mxu0 %v674
    %737 = vmatpush.xpose.msra.mxu0 %v671
    %738 = vmatpush.xpose.msra.mxu0 %v668
    %739 = vmatpush.xpose.msra.mxu0 %v665
    %740 = vmatpush.xpose.msra.mxu0 %v662
    %741 = vmatpush.xpose.msra.mxu0 %v659
    %742 = vmatpush.xpose.msra.mxu0 %v656
    %743 = vmatpush.xpose.msra.mxu0 %v653
    %744 = vmatpush.xpose.msra.mxu0 %v650
    %745 = vmatpush.xpose.msra.mxu0 %v647
    %746 = vmatpush.xpose.msra.mxu0 %v644
    %747 = vmatpush.xpose.msra.mxu0 %v641
    %748 = vmatpush.xpose.msra.mxu0 %v638
    %749 = vmatmul.f32.gmra.mxu0 %v635
    %v750 = vpop.f32.mrf.mxu0
    %v751 = vadd.f32 %v633, %v750
    %752 = vdwg.mxu0
    %753 = vmatpush.xpose.msra.mxu0 %v731
    %754 = vmatpush.xpose.msra.mxu0 %v728
    %755 = vmatpush.xpose.msra.mxu0 %v725
    %756 = vmatpush.xpose.msra.mxu0 %v722
    %757 = vmatpush.xpose.msra.mxu0 %v719
    %758 = vmatpush.xpose.msra.mxu0 %v716
    %759 = vmatpush.xpose.msra.mxu0 %v713
    %760 = vmatpush.xpose.msra.mxu0 %v710
    %761 = vmatpush.xpose.msra.mxu0 %v707
    %762 = vmatpush.xpose.msra.mxu0 %v704
    %763 = vmatpush.xpose.msra.mxu0 %v701
    %764 = vmatpush.xpose.msra.mxu0 %v698
    %765 = vmatpush.xpose.msra.mxu0 %v695
    %766 = vmatpush.xpose.msra.mxu0 %v692
    %767 = vmatpush.xpose.msra.mxu0 %v689
    %768 = vmatpush.xpose.msra.mxu0 %v686
    %769 = vmatmul.f32.gmra.mxu0 %v635
    %v770 = vpop.f32.mrf.mxu0
    %v771 = vadd.f32 %v633, %v770
    %772 = vdwg.mxu0
    %v775 = vrot.slane %v771, 7
    %vm776 = vcmask 1040384
    %v777 = vsel %vm776, %v751, %v775
    %v779 = vlaneseq
    %vm780 = vcmp.ge.s32.totalorder %v779, 0
    %vm781 = vcmp.lt.s32.totalorder %v779, 256
    %vm782 = vmand %vm780, %vm781
    %783 = vst.msk [vmem:[#allocation3] sm:$0x3] %vm782, %v777
    // Predicated region
    $region34: #{tpu_custom_call.1} parent=1 // pred_check
      _
    $region35: #{tpu_custom_call.1} parent=1 // pred_check_branch
      %785 = sbr.rel (0) target = $region37
    $region36: #{tpu_custom_call.1} parent=1 // pred_region
      %787 = vsyncadd [#allocation4], 0
      %s789 = sshll.u32 [#allocation3], 4
      %s790 = int_to_ptr.vmem [resolvable:$true] %s789
      %s791 = sshll.u32 %s8, 4
      %s792 = int_to_ptr.hbm [resolvable:$true] %s791
      %794 = dma.vmem_to_hbm [thread:$0]  %s790, 32, %s792, [#allocation4]
    $region37: #{tpu_custom_call.1} parent=1 // pred_fallthru
      _
    // Predicated region
    $region38: #{tpu_custom_call.1} parent=1 // pred_check
      _
    $region39: #{tpu_custom_call.1} parent=1 // pred_check_branch
      %796 = sbr.rel (0) target = $region41
    $region40: #{tpu_custom_call.1} parent=1 // pred_region
      %798 = dma.done [#allocation4], 32
    $region41: #{tpu_custom_call.1} parent=1 // pred_fallthru
      _
    %799 = vsyncpa [#allocation4], 1

</llo_original>
